<compile_context>
chip_gen: v5e
topology: v5e:2x2
jax: 0.10.0
libtpu: 0.0.40
codegen_flags: <defaults>
</compile_context>

<pallas_src>
import jax
import jax.numpy as jnp
from jax import lax
from jax.experimental import pallas as pl
from jax.experimental.pallas import tpu as pltpu


# ----------------------------------------------------------------------------
# Pallas kernel
# ----------------------------------------------------------------------------
def make_compgcn_kernel(dims, short_cut, concat_hidden, compute_dtype):
    num_layers = len(dims) - 1

    def kernel(uid_ref, n2g_ref, table_ref, inv_ref, *rest):
        # rest = [w0_t, b0, w1_t, b1, ..., node_out_ref, graph_ref]
        w_refs = rest[:2 * num_layers]
        node_out_ref = rest[2 * num_layers]
        graph_ref = rest[2 * num_layers + 1]

        tb = uid_ref.shape[0]
        num_unit = table_ref.shape[0]
        num_graphs = graph_ref.shape[0]

        # ---- embedding lookup in-kernel as a one-hot matmul (vocab is tiny) ----
        uid = uid_ref[...]                                           # (TB, 1) int32
        unit_iota = lax.broadcasted_iota(jnp.int32, (tb, num_unit), 1)
        onehot = (unit_iota == uid).astype(compute_dtype)            # (TB, num_unit)
        layer_input = jnp.dot(onehot, table_ref[...],
                              preferred_element_type=jnp.float32)    # (TB, D) f32

        # ---- MLP layers (MXU matmuls over the whole node tile) ----
        hiddens = []
        for layer in range(num_layers):
            w_t = w_refs[2 * layer][...]                             # (dims[l], dims[l+1])
            b = w_refs[2 * layer + 1][...]                           # (1, dims[l+1]) f32
            h = jnp.dot(layer_input.astype(compute_dtype), w_t,
                        preferred_element_type=jnp.float32) + b
            if layer < num_layers - 1:                               # relu on all but last
                h = jnp.maximum(h, 0.0)
            if short_cut and dims[layer] == dims[layer + 1]:         # static shape check
                h = h + layer_input
            hiddens.append(h)
            layer_input = h

        node_feature = (jnp.concatenate(hiddens, axis=-1)
                        if concat_hidden else hiddens[-1])           # (TB, G) f32
        node_out_ref[...] = node_feature.astype(node_out_ref.dtype)

        # ---- readout: membership built on the VPU, contracted on the MXU ----
        n2g_row = n2g_ref[...]                                       # (1, TB) int32
        gid_iota = lax.broadcasted_iota(jnp.int32, (num_graphs, tb), 0)
        member = (gid_iota == n2g_row).astype(jnp.float32)           # pad rows (-1) -> 0
        part = jnp.dot(member, node_feature,
                       preferred_element_type=jnp.float32)           # (B, G)

        step = pl.program_id(0)

        @pl.when(step == 0)
        def _init():
            graph_ref[...] = jnp.zeros_like(graph_ref)

        graph_ref[...] += part                                       # resident accumulator

        @pl.when(step == pl.num_programs(0) - 1)
        def _finalize():
            graph_ref[...] = graph_ref[...] * inv_ref[...]           # 1/|graph| (1s for sum)

    return kernel


# ----------------------------------------------------------------------------
# Wrapper (JAX glue: id padding, inverse counts, BlockSpecs)
# ----------------------------------------------------------------------------
def glycan_compgcn_forward(unit_type, node2graph, num_graphs, params, *,
                           input_dim, hidden_dims, short_cut=False,
                           concat_hidden=False, readout="mean", node_block=256,
                           compute_dtype=jnp.float32,
                           single_buffer_weights=False, vmem_limit_bytes=None):
    if readout not in ("mean", "sum"):
        # TODO(synk): 'max' and 'dual' readouts need a segment-max; only mean/sum here.
        raise NotImplementedError("only mean/sum readout implemented")

    dims = [input_dim] + list(hidden_dims)
    num_layers = len(dims) - 1
    node_out_dim = sum(hidden_dims) if concat_hidden else hidden_dims[-1]
    graph_dim = node_out_dim
    B = int(num_graphs)
    N = int(unit_type.shape[0])

    # MXU-friendly node tile: one tile if the graph is small, otherwise a lane-aligned
    # (multiple of 128) tile so the (1, Npad) id stream blocks cleanly.
    n16 = 16 * pl.cdiv(N, 16)
    if n16 <= node_block:
        tb = n16
    else:
        tb = 128 * pl.cdiv(node_block, 128)
    Npad = tb * pl.cdiv(N, tb)
    num_blocks = Npad // tb
    pad = Npad - N

    uid = jnp.pad(unit_type.astype(jnp.int32), (0, pad)).reshape(Npad, 1)
    n2g = jnp.pad(node2graph.astype(jnp.int32), (0, pad),
                  constant_values=-1).reshape(1, Npad)               # lane layout

    if readout == "mean":
        counts = jnp.zeros((B,), jnp.float32).at[node2graph].add(1.0)
        inv = (1.0 / jnp.maximum(counts, 1.0)).reshape(B, 1)
    else:
        inv = jnp.ones((B, 1), jnp.float32)

    table = params["embedding_init"].astype(compute_dtype)
    w_ts = [w.astype(compute_dtype) for w in params["w_t"]]          # pre-transposed
    bs = [b.astype(jnp.float32) for b in params["b"]]

    inputs = [uid, n2g, table, inv]
    for layer in range(num_layers):
        inputs += [w_ts[layer], bs[layer]]

    def resident_spec(shape):
        nd = len(shape)
        kwargs = {}
        if single_buffer_weights:
            kwargs["pipeline_mode"] = pl.Buffered(1)  # weights never change across steps
        return pl.BlockSpec(shape, lambda i, _nd=nd: (0,) * _nd, **kwargs)

    in_specs = [
        pl.BlockSpec((tb, 1), lambda i: (i, 0)),      # unit ids (per tile)
        pl.BlockSpec((1, tb), lambda i: (0, i)),      # node->graph ids (per tile, lanes)
        resident_spec(table.shape),                   # embedding table (VMEM resident)
        resident_spec(inv.shape),                     # 1/|graph| column
    ] + [resident_spec(a.shape) for a in inputs[4:]]  # layer weights / biases

    out_specs = (
        pl.BlockSpec((tb, node_out_dim), lambda i: (i, 0)),
        pl.BlockSpec((B, graph_dim), lambda i: (0, 0)),   # resident readout accumulator
    )
    out_shapes = (
        jax.ShapeDtypeStruct((Npad, node_out_dim), compute_dtype),
        jax.ShapeDtypeStruct((B, graph_dim), jnp.float32),
    )

    cp_kwargs = dict(dimension_semantics=("arbitrary",))  # readout accumulates over axis
    if vmem_limit_bytes is not None:
        cp_kwargs["vmem_limit_bytes"] = vmem_limit_bytes

    kernel = make_compgcn_kernel(dims, short_cut, concat_hidden, compute_dtype)
    node_out_pad, graph_feature = pl.pallas_call(
        kernel,
        out_shape=out_shapes,
        grid=(num_blocks,),
        in_specs=in_specs,
        out_specs=out_specs,
        compiler_params=pltpu.CompilerParams(**cp_kwargs),
    )(*inputs)

    return {"graph_feature": graph_feature, "node_feature": node_out_pad[:N]}


# ----------------------------------------------------------------------------
# Pure-JAX reference (for correctness check)
# ----------------------------------------------------------------------------
def compgcn_reference(unit_type, node2graph, num_graphs, params, *,
                      input_dim, hidden_dims, short_cut=False,
                      concat_hidden=False, readout="mean"):
    dims = [input_dim] + list(hidden_dims)
    L = len(dims) - 1
    layer_input = jnp.take(params["embedding_init"], unit_type, axis=0)
    hiddens = []
    for i in range(L):
        h = layer_input @ params["w_t"][i] + params["b"][i]
        if i < L - 1:
            h = jnp.maximum(h, 0.0)
        if short_cut and dims[i] == dims[i + 1]:
            h = h + layer_input
        hiddens.append(h)
        layer_input = h
    node_feature = jnp.concatenate(hiddens, -1) if concat_hidden else hiddens[-1]
    sums = jnp.zeros((num_graphs, node_feature.shape[-1]),
                     jnp.float32).at[node2graph].add(node_feature)
    if readout == "mean":
        counts = jnp.maximum(
            jnp.zeros((num_graphs,), jnp.float32).at[node2graph].add(1.0), 1.0)
        graph_feature = sums / counts[:, None]
    else:
        graph_feature = sums
    return {"graph_feature": graph_feature, "node_feature": node_feature}


# ----------------------------------------------------------------------------
# Deterministic parameter init (shapes follow GlycanCompGCN.__init__)
# ----------------------------------------------------------------------------
def init_params(key, input_dim, hidden_dims, num_unit):
    dims = [input_dim] + list(hidden_dims)
    num_layers = len(dims) - 1
    keys = jax.random.split(key, 1 + 2 * num_layers)
    ki = iter(range(len(keys)))

    params = {"embedding_init": jax.random.normal(
        keys[next(ki)], (num_unit, input_dim), jnp.float32)}
    # TODO(synk): relation_embedding is declared in __init__ but unused in forward.

    params["w_t"], params["b"] = [], []
    for i in range(num_layers):
        bound = 1.0 / (dims[i] ** 0.5)
        params["w_t"].append(jax.random.uniform(
            keys[next(ki)], (dims[i], dims[i + 1]), jnp.float32, -bound, bound))
        params["b"].append(jax.random.uniform(
            keys[next(ki)], (1, dims[i + 1]), jnp.float32, -bound, bound))
    return params


# ----------------------------------------------------------------------------
def _run_case(key, *, input_dim, hidden_dims, num_unit, nodes_per_graph,
              short_cut, concat_hidden, node_block, compute_dtype, rtol, atol):
    k_param, k_data = jax.random.split(key)
    params = init_params(k_param, input_dim, hidden_dims, num_unit)

    num_graphs = len(nodes_per_graph)
    N = sum(nodes_per_graph)
    unit_type = jax.random.randint(k_data, (N,), 0, num_unit, jnp.int32)
    node2graph = jnp.concatenate(
        [jnp.full((n,), g, jnp.int32) for g, n in enumerate(nodes_per_graph)])

    out = glycan_compgcn_forward(
        unit_type, node2graph, num_graphs, params,
        input_dim=input_dim, hidden_dims=hidden_dims, short_cut=short_cut,
        concat_hidden=concat_hidden, readout="mean", node_block=node_block,
        compute_dtype=compute_dtype)
    out = jax.block_until_ready(out)

    ref = compgcn_reference(
        unit_type, node2graph, num_graphs, params,
        input_dim=input_dim, hidden_dims=hidden_dims, short_cut=short_cut,
        concat_hidden=concat_hidden, readout="mean")

    node_out_dim = sum(hidden_dims) if concat_hidden else hidden_dims[-1]
    assert out["graph_feature"].shape == (num_graphs, node_out_dim)
    assert out["node_feature"].shape == (N, node_out_dim)
    node_f32 = out["node_feature"].astype(jnp.float32)
    graph_f32 = out["graph_feature"].astype(jnp.float32)
    assert bool(jnp.all(jnp.isfinite(node_f32)))
    assert bool(jnp.all(jnp.isfinite(graph_f32)))
    assert bool(jnp.allclose(node_f32, ref["node_feature"], rtol=rtol, atol=atol))
    assert bool(jnp.allclose(graph_f32, ref["graph_feature"], rtol=rtol, atol=atol))


if __name__ == "__main__":
    key = jax.random.PRNGKey(0)
    k1, k2, k3 = jax.random.split(key, 3)

    # Case A: small graph, single node tile, f32 compute (tight tolerance).
    _run_case(k1, input_dim=16, hidden_dims=[32, 32], num_unit=24,
              nodes_per_graph=[5, 8], short_cut=False, concat_hidden=False,
              node_block=256, compute_dtype=jnp.float32, rtol=1e-5, atol=1e-5)

    # Case B: multi-block grid (exercises the resident readout accumulator across
    # steps), short_cut + concat_hidden with non-uniform hidden dims.
    _run_case(k2, input_dim=48, hidden_dims=[48, 32], num_unit=20,
              nodes_per_graph=[70, 60, 70], short_cut=True, concat_hidden=True,
              node_block=128, compute_dtype=jnp.float32, rtol=1e-4, atol=1e-4)

    # Case C: bf16 matmul-input path (v6e/v7x MXU), relaxed tolerance.
    _run_case(k3, input_dim=16, hidden_dims=[32, 32], num_unit=24,
              nodes_per_graph=[5, 8], short_cut=False, concat_hidden=False,
              node_block=256, compute_dtype=jnp.bfloat16, rtol=5e-2, atol=5e-2)

    print("KERNEL_OK")
</pallas_src>

<mosaic_0001>
module attributes {stable_mosaic.version = 11 : i64} {
  func.func @kernel(%arg0: i32, %arg1: memref<16x1xi32, #tpu.memory_space<vmem>>, %arg2: memref<1x16xi32, #tpu.memory_space<vmem>>, %arg3: memref<24x16xf32, #tpu.memory_space<vmem>>, %arg4: memref<2x1xf32, #tpu.memory_space<vmem>>, %arg5: memref<16x32xf32, #tpu.memory_space<vmem>>, %arg6: memref<1x32xf32, #tpu.memory_space<vmem>>, %arg7: memref<32x32xf32, #tpu.memory_space<vmem>>, %arg8: memref<1x32xf32, #tpu.memory_space<vmem>>, %arg9: memref<16x32xf32, #tpu.memory_space<vmem>>, %arg10: memref<2x32xf32, #tpu.memory_space<vmem>>) attributes {dimension_semantics = [#tpu.dimension_semantics<arbitrary>], iteration_bounds = array<i64: 1>, scalar_prefetch = 0 : i64, scratch_operands = 0 : i64, tpu.core_type = #tpu.core_type<tc>, window_params = [{transform_indices = @transform_0, window_bounds = array<i64: 16, 1>}, {transform_indices = @transform_1, window_bounds = array<i64: 1, 16>}, {pipeline_mode = #tpu.pipeline_mode<synchronous>, transform_indices = @transform_2, window_bounds = array<i64: 24, 16>}, {pipeline_mode = #tpu.pipeline_mode<synchronous>, transform_indices = @transform_3, window_bounds = array<i64: 2, 1>}, {pipeline_mode = #tpu.pipeline_mode<synchronous>, transform_indices = @transform_4, window_bounds = array<i64: 16, 32>}, {pipeline_mode = #tpu.pipeline_mode<synchronous>, transform_indices = @transform_5, window_bounds = array<i64: 1, 32>}, {pipeline_mode = #tpu.pipeline_mode<synchronous>, transform_indices = @transform_6, window_bounds = array<i64: 32, 32>}, {pipeline_mode = #tpu.pipeline_mode<synchronous>, transform_indices = @transform_7, window_bounds = array<i64: 1, 32>}, {transform_indices = @transform_8, window_bounds = array<i64: 16, 32>}, {pipeline_mode = #tpu.pipeline_mode<synchronous>, transform_indices = @transform_9, window_bounds = array<i64: 2, 32>}]} {
    %c0 = arith.constant 0 : index
    %c0_0 = arith.constant 0 : index
    %0 = vector.load %arg1[%c0, %c0_0] : memref<16x1xi32, #tpu.memory_space<vmem>>, vector<16x1xi32>
    %1 = tpu.iota {dimensions = array<i32: 1>} : vector<16x24xi32>
    %2 = vector.broadcast %0 : vector<16x1xi32> to vector<16x24xi32>
    %3 = arith.cmpi eq, %1, %2 : vector<16x24xi32>
    %4 = arith.extui %3 : vector<16x24xi1> to vector<16x24xi32>
    %5 = arith.sitofp %4 : vector<16x24xi32> to vector<16x24xf32>
    %c0_1 = arith.constant 0 : index
    %c0_2 = arith.constant 0 : index
    %6 = vector.load %arg3[%c0_1, %c0_2] : memref<24x16xf32, #tpu.memory_space<vmem>>, vector<24x16xf32>
    %cst = arith.constant dense<0.000000e+00> : vector<16x16xf32>
    %7 = tpu.matmul %5, %6, %cst {dimension_numbers = #tpu.dot_dimension_numbers<[1], [0], [0], [1], [0, 0, 1, 1], [], []>} : vector<16x24xf32>, vector<24x16xf32>, vector<16x16xf32> -> vector<16x16xf32>
    %c0_3 = arith.constant 0 : index
    %c0_4 = arith.constant 0 : index
    %8 = vector.load %arg5[%c0_3, %c0_4] : memref<16x32xf32, #tpu.memory_space<vmem>>, vector<16x32xf32>
    %c0_5 = arith.constant 0 : index
    %c0_6 = arith.constant 0 : index
    %9 = vector.load %arg6[%c0_5, %c0_6] : memref<1x32xf32, #tpu.memory_space<vmem>>, vector<1x32xf32>
    %cst_7 = arith.constant dense<0.000000e+00> : vector<16x32xf32>
    %10 = tpu.matmul %7, %8, %cst_7 {dimension_numbers = #tpu.dot_dimension_numbers<[1], [0], [0], [1], [0, 0, 1, 1], [], []>} : vector<16x16xf32>, vector<16x32xf32>, vector<16x32xf32> -> vector<16x32xf32>
    %11 = vector.broadcast %9 : vector<1x32xf32> to vector<16x32xf32>
    %12 = arith.addf %10, %11 : vector<16x32xf32>
    %cst_8 = arith.constant 0.000000e+00 : f32
    %13 = vector.broadcast %cst_8 : f32 to vector<16x32xf32>
    %14 = arith.maximumf %12, %13 : vector<16x32xf32>
    %c0_9 = arith.constant 0 : index
    %c0_10 = arith.constant 0 : index
    %15 = vector.load %arg7[%c0_9, %c0_10] : memref<32x32xf32, #tpu.memory_space<vmem>>, vector<32x32xf32>
    %c0_11 = arith.constant 0 : index
    %c0_12 = arith.constant 0 : index
    %16 = vector.load %arg8[%c0_11, %c0_12] : memref<1x32xf32, #tpu.memory_space<vmem>>, vector<1x32xf32>
    %cst_13 = arith.constant dense<0.000000e+00> : vector<16x32xf32>
    %17 = tpu.matmul %14, %15, %cst_13 {dimension_numbers = #tpu.dot_dimension_numbers<[1], [0], [0], [1], [0, 0, 1, 1], [], []>} : vector<16x32xf32>, vector<32x32xf32>, vector<16x32xf32> -> vector<16x32xf32>
    %18 = vector.broadcast %16 : vector<1x32xf32> to vector<16x32xf32>
    %19 = arith.addf %17, %18 : vector<16x32xf32>
    %c0_14 = arith.constant 0 : index
    %c0_15 = arith.constant 0 : index
    %20 = vector.load %arg9[%c0_14, %c0_15] : memref<16x32xf32, #tpu.memory_space<vmem>>, vector<16x32xf32>
    tpu.vector_store %arg9[%c0_14, %c0_15], %19 {strides = array<i32>} : memref<16x32xf32, #tpu.memory_space<vmem>>, vector<16x32xf32>,
    %c0_16 = arith.constant 0 : index
    %c0_17 = arith.constant 0 : index
    %21 = vector.load %arg2[%c0_16, %c0_17] : memref<1x16xi32, #tpu.memory_space<vmem>>, vector<1x16xi32>
    %22 = tpu.iota {dimensions = array<i32: 0>} : vector<2x16xi32>
    %23 = vector.broadcast %21 : vector<1x16xi32> to vector<2x16xi32>
    %24 = arith.cmpi eq, %22, %23 : vector<2x16xi32>
    %25 = arith.extui %24 : vector<2x16xi1> to vector<2x16xi32>
    %26 = arith.sitofp %25 : vector<2x16xi32> to vector<2x16xf32>
    %cst_18 = arith.constant dense<0.000000e+00> : vector<2x32xf32>
    %27 = tpu.matmul %26, %19, %cst_18 {dimension_numbers = #tpu.dot_dimension_numbers<[1], [0], [0], [1], [0, 0, 1, 1], [], []>} : vector<2x16xf32>, vector<16x32xf32>, vector<2x32xf32> -> vector<2x32xf32>
    %c0_i32 = arith.constant 0 : i32
    %28 = arith.cmpi eq, %arg0, %c0_i32 : i32
    %29 = arith.extui %28 : i1 to i32
    %c0_i32_19 = arith.constant 0 : i32
    %30 = arith.cmpi ne, %29, %c0_i32_19 : i32
    scf.if %30 {
      %cst_26 = arith.constant 0.000000e+00 : f32
      %37 = vector.broadcast %cst_26 : f32 to vector<2x32xf32>
      %c0_27 = arith.constant 0 : index
      %c0_28 = arith.constant 0 : index
      %38 = vector.load %arg10[%c0_27, %c0_28] : memref<2x32xf32, #tpu.memory_space<vmem>>, vector<2x32xf32>
      tpu.vector_store %arg10[%c0_27, %c0_28], %37 {strides = array<i32>} : memref<2x32xf32, #tpu.memory_space<vmem>>, vector<2x32xf32>,
    } else {
    }
    %c0_20 = arith.constant 0 : index
    %c0_21 = arith.constant 0 : index
    %31 = vector.load %arg10[%c0_20, %c0_21] : memref<2x32xf32, #tpu.memory_space<vmem>>, vector<2x32xf32>
    %32 = arith.addf %31, %27 : vector<2x32xf32>
    %c0_22 = arith.constant 0 : index
    %c0_23 = arith.constant 0 : index
    %33 = vector.load %arg10[%c0_22, %c0_23] : memref<2x32xf32, #tpu.memory_space<vmem>>, vector<2x32xf32>
    tpu.vector_store %arg10[%c0_22, %c0_23], %32 {strides = array<i32>} : memref<2x32xf32, #tpu.memory_space<vmem>>, vector<2x32xf32>,
    %c0_i32_24 = arith.constant 0 : i32
    %34 = arith.cmpi eq, %arg0, %c0_i32_24 : i32
    %35 = arith.extui %34 : i1 to i32
    %c0_i32_25 = arith.constant 0 : i32
    %36 = arith.cmpi ne, %35, %c0_i32_25 : i32
    scf.if %36 {
      %c0_26 = arith.constant 0 : index
      %c0_27 = arith.constant 0 : index
      %37 = vector.load %arg10[%c0_26, %c0_27] : memref<2x32xf32, #tpu.memory_space<vmem>>, vector<2x32xf32>
      %c0_28 = arith.constant 0 : index
      %c0_29 = arith.constant 0 : index
      %38 = vector.load %arg4[%c0_28, %c0_29] : memref<2x1xf32, #tpu.memory_space<vmem>>, vector<2x1xf32>
      %39 = vector.broadcast %38 : vector<2x1xf32> to vector<2x32xf32>
      %40 = arith.mulf %37, %39 : vector<2x32xf32>
      %c0_30 = arith.constant 0 : index
      %c0_31 = arith.constant 0 : index
      %41 = vector.load %arg10[%c0_30, %c0_31] : memref<2x32xf32, #tpu.memory_space<vmem>>, vector<2x32xf32>
      tpu.vector_store %arg10[%c0_30, %c0_31], %40 {strides = array<i32>} : memref<2x32xf32, #tpu.memory_space<vmem>>, vector<2x32xf32>,
    } else {
    }
    return
  }
  func.func @transform_0(%arg0: i32) -> (i32, i32) {
    %c0_i32 = arith.constant 0 : i32
    %c0_i32_0 = arith.constant 0 : i32
    return %arg0, %c0_i32 : i32, i32
  }
  func.func @transform_1(%arg0: i32) -> (i32, i32) {
    %c0_i32 = arith.constant 0 : i32
    %c0_i32_0 = arith.constant 0 : i32
    return %c0_i32, %arg0 : i32, i32
  }
  func.func @transform_2(%arg0: i32) -> (i32, i32) {
    %c0_i32 = arith.constant 0 : i32
    %c0_i32_0 = arith.constant 0 : i32
    %c0_i32_1 = arith.constant 0 : i32
    return %c0_i32, %c0_i32_0 : i32, i32
  }
  func.func @transform_3(%arg0: i32) -> (i32, i32) {
    %c0_i32 = arith.constant 0 : i32
    %c0_i32_0 = arith.constant 0 : i32
    %c0_i32_1 = arith.constant 0 : i32
    return %c0_i32, %c0_i32_0 : i32, i32
  }
  func.func @transform_4(%arg0: i32) -> (i32, i32) {
    %c0_i32 = arith.constant 0 : i32
    %c0_i32_0 = arith.constant 0 : i32
    %c0_i32_1 = arith.constant 0 : i32
    return %c0_i32, %c0_i32_0 : i32, i32
  }
  func.func @transform_5(%arg0: i32) -> (i32, i32) {
    %c0_i32 = arith.constant 0 : i32
    %c0_i32_0 = arith.constant 0 : i32
    %c0_i32_1 = arith.constant 0 : i32
    return %c0_i32, %c0_i32_0 : i32, i32
  }
  func.func @transform_6(%arg0: i32) -> (i32, i32) {
    %c0_i32 = arith.constant 0 : i32
    %c0_i32_0 = arith.constant 0 : i32
    %c0_i32_1 = arith.constant 0 : i32
    return %c0_i32, %c0_i32_0 : i32, i32
  }
  func.func @transform_7(%arg0: i32) -> (i32, i32) {
    %c0_i32 = arith.constant 0 : i32
    %c0_i32_0 = arith.constant 0 : i32
    %c0_i32_1 = arith.constant 0 : i32
    return %c0_i32, %c0_i32_0 : i32, i32
  }
  func.func @transform_8(%arg0: i32) -> (i32, i32) {
    %c0_i32 = arith.constant 0 : i32
    %c0_i32_0 = arith.constant 0 : i32
    return %arg0, %c0_i32 : i32, i32
  }
  func.func @transform_9(%arg0: i32) -> (i32, i32) {
    %c0_i32 = arith.constant 0 : i32
    %c0_i32_0 = arith.constant 0 : i32
    %c0_i32_1 = arith.constant 0 : i32
    return %c0_i32, %c0_i32_0 : i32, i32
  }
}

</mosaic_0001>

<llo_original>
// kernel: tpu_custom_call.1
$region0: #{tpu_custom_call.1}
  #allocation0 [shape = 'u32[]', space=smem, size = 0x4, offset = 0x4, fixed_abs, tag = 'smem constant byte address 0x4 - core index']
  #allocation1 [shape = 'u32[72,128]{1,0:T(1,128)}', space=vmem, size = 0x9000, scoped, tag = 'internal scratch']
  %s0 = inlined_call_operand.vmem [shape: s32[16,1], index: 0, kind: input, shape index: {}]
  %s1 = inlined_call_operand.vmem [shape: s32[1,16], index: 1, kind: input, shape index: {}]
  %s2 = inlined_call_operand.vmem [shape: f32[24,16], index: 2, kind: input, shape index: {}]
  %s3 = inlined_call_operand.vmem [shape: f32[2,1], index: 3, kind: input, shape index: {}]
  %s4 = inlined_call_operand.hbm [shape: f32[16,32], index: 4, kind: input, shape index: {}]
  %s5 = inlined_call_operand.vmem [shape: f32[1,32], index: 5, kind: input, shape index: {}]
  %s6 = inlined_call_operand.vmem [shape: f32[32,32], index: 6, kind: input, shape index: {}]
  %s7 = inlined_call_operand.vmem [shape: f32[1,32], index: 7, kind: input, shape index: {}]
  %s8 = inlined_call_operand.hbm [shape: f32[16,32], index: 8, kind: output, shape index: {0}]
  %s9 = inlined_call_operand.hbm [shape: f32[2,32], index: 9, kind: output, shape index: {1}]
  %10 = xla_tuple %s8, %s9
  %s11 = sld [smem:[#allocation0]]
  $region62: #{tpu_custom_call.1} parent=0
    _
  %s13 = ssub.s32 1, %s11
  %s14 = scalar_select 0, %s13, %s11
  $region1: #{tpu_custom_call.1} parent=0
    #allocation2 [shape = 'u8[8192]{0}', space=vmem, size = 0x2000, scoped, tag = 'input window, operand 4, single buffered']
    #allocation3 [shape = 's32[1]{0}', space=sflag, size = 0x4, scoped, tag = 'scoped memory for tpu_custom_call.1']
    #allocation4 [shape = 's32[1]{0}', space=sflag, size = 0x4, scoped, tag = 'scoped memory for tpu_custom_call.1']
    #allocation5 [shape = 'u8[8192]{0}', space=vmem, size = 0x2000, scoped, tag = 'output window, operand 0, single buffered']
    #allocation6 [shape = 'u8[1024]{0}', space=vmem, size = 0x400, scoped, tag = 'output window, operand 1, single buffered']
    #allocation7 [shape = 's32[1]{0}', space=sflag, size = 0x4, scoped, tag = 'scoped memory for tpu_custom_call.1']
    %15 = vsyncpa [#allocation3], 0
    %16 = vsyncpa [#allocation4], 0
    %17 = vsyncpa [#allocation7], 0
    // Predicated region
    $region2: #{tpu_custom_call.1} parent=1 // pred_check
      _
    $region3: #{tpu_custom_call.1} parent=1 // pred_check_branch
      %19 = sbr.rel (0) target = $region5
    $region4: #{tpu_custom_call.1} parent=1 // pred_region
      _
    $region5: #{tpu_custom_call.1} parent=1 // pred_fallthru
      _
    // Predicated region
    $region6: #{tpu_custom_call.1} parent=1 // pred_check
      _
    $region7: #{tpu_custom_call.1} parent=1 // pred_check_branch
      %21 = sbr.rel (0) target = $region9
    $region8: #{tpu_custom_call.1} parent=1 // pred_region
      _
    $region9: #{tpu_custom_call.1} parent=1 // pred_fallthru
      _
    // Predicated region
    $region10: #{tpu_custom_call.1} parent=1 // pred_check
      _
    $region11: #{tpu_custom_call.1} parent=1 // pred_check_branch
      %23 = sbr.rel (0) target = $region13
    $region12: #{tpu_custom_call.1} parent=1 // pred_region
      _
    $region13: #{tpu_custom_call.1} parent=1 // pred_fallthru
      _
    // Predicated region
    $region14: #{tpu_custom_call.1} parent=1 // pred_check
      _
    $region15: #{tpu_custom_call.1} parent=1 // pred_check_branch
      %25 = sbr.rel (0) target = $region17
    $region16: #{tpu_custom_call.1} parent=1 // pred_region
      _
    $region17: #{tpu_custom_call.1} parent=1 // pred_fallthru
      _
    // Predicated region
    $region18: #{tpu_custom_call.1} parent=1 // pred_check
      _
    $region19: #{tpu_custom_call.1} parent=1 // pred_check_branch
      %27 = sbr.rel (0) target = $region21
    $region20: #{tpu_custom_call.1} parent=1 // pred_region
      %29 = vsyncadd [#allocation3], 0
      %s30 = sshll.u32 %s4, 4
      %s31 = int_to_ptr.hbm [resolvable:$true] %s30
      %s32 = sshll.u32 [#allocation2], 4
      %s33 = int_to_ptr.vmem [resolvable:$true] %s32
      %38 = dma.hbm_to_vmem [thread:$0]  %s31, 256, %s33, [#allocation3], 128, 128, 8
    $region21: #{tpu_custom_call.1} parent=1 // pred_fallthru
      _
    // Predicated region
    $region22: #{tpu_custom_call.1} parent=1 // pred_check
      _
    $region23: #{tpu_custom_call.1} parent=1 // pred_check_branch
      %40 = sbr.rel (0) target = $region25
    $region24: #{tpu_custom_call.1} parent=1 // pred_region
      _
    $region25: #{tpu_custom_call.1} parent=1 // pred_fallthru
      _
    // Predicated region
    $region26: #{tpu_custom_call.1} parent=1 // pred_check
      _
    $region27: #{tpu_custom_call.1} parent=1 // pred_check_branch
      %42 = sbr.rel (0) target = $region29
    $region28: #{tpu_custom_call.1} parent=1 // pred_region
      _
    $region29: #{tpu_custom_call.1} parent=1 // pred_fallthru
      _
    // Predicated region
    $region30: #{tpu_custom_call.1} parent=1 // pred_check
      _
    $region31: #{tpu_custom_call.1} parent=1 // pred_check_branch
      %44 = sbr.rel (0) target = $region33
    $region32: #{tpu_custom_call.1} parent=1 // pred_region
      _
    $region33: #{tpu_custom_call.1} parent=1 // pred_fallthru
      _
    // Predicated region
    $region34: #{tpu_custom_call.1} parent=1 // pred_check
      _
    $region35: #{tpu_custom_call.1} parent=1 // pred_check_branch
      %46 = sbr.rel (0) target = $region37
    $region36: #{tpu_custom_call.1} parent=1 // pred_region
      %48 = dma.done [#allocation3], 256
    $region37: #{tpu_custom_call.1} parent=1 // pred_fallthru
      _
    %v49 = vld [vmem:[%s0] sm:$0xff]
    %v50 = vld [vmem:[%s0 + $0x8] sm:$0xff]
    %v51 = vlaneseq
    %v52 = vand.u32 %v51, 127
    %53 = vset.pattern.permute.xlu0 0
    %54 = vperm.xlu0 %53, %v49
    %v55 = vpop.permute.xlu0 %54
    %56 = vset.pattern.permute.xlu0 0
    %57 = vperm.xlu0 %56, %v50
    %v58 = vpop.permute.xlu0 %57
    %vm59 = vcmp.eq.s32.totalorder %v52, %v55
    %vm60 = vcmp.eq.s32.totalorder %v52, %v58
    %v61 = vsel %vm59, 1, 0
    %v62 = vsel %vm60, 1, 0
    %v63 = vcvt.s32.f32 %v61
    %v64 = vcvt.s32.f32 %v62
    %v65 = vld [vmem:[%s2] sm:$0xff]
    %v66 = vld [vmem:[%s2 + $0x8] sm:$0xff]
    %v67 = vld [vmem:[%s2 + $0x10] sm:$0xff]
    %vm68 = vcmask 195584
    %v70 = vsel %vm68, %v63, 0
    %v73 = vsel %vm68, %v64, 0
    %75 = vmatpush.msra.mxu0 0.0
    %76 = vmatpush.msra.mxu0 0.0
    %77 = vmatpush.msra.mxu0 0.0
    %78 = vmatpush.msra.mxu0 0.0
    %79 = vmatpush.msra.mxu0 0.0
    %80 = vmatpush.msra.mxu0 0.0
    %81 = vmatpush.msra.mxu0 0.0
    %82 = vmatpush.msra.mxu0 0.0
    %83 = vmatpush.msra.mxu0 0.0
    %84 = vmatpush.msra.mxu0 0.0
    %85 = vmatpush.msra.mxu0 0.0
    %86 = vmatpush.msra.mxu0 0.0
    %87 = vmatpush.msra.mxu0 0.0
    %88 = vmatpush.msra.mxu0 %v67
    %89 = vmatpush.msra.mxu0 %v66
    %90 = vmatpush.msra.mxu0 %v65
    %91 = vmatmul.f32.gmra.mxu0 %v70
    %v92 = vpop.f32.mrf.mxu0
    %v93 = vadd.f32 0.0, %v92
    %94 = vmatmul.f32.gmra.mxu0 %v73
    %v95 = vpop.f32.mrf.mxu0
    %v96 = vadd.f32 0.0, %v95
    %97 = vdwg.mxu0
    %v98 = vld [vmem:[#allocation2] sm:$0xff]
    %v99 = vld [vmem:[#allocation2 + $0x8] sm:$0xff]
    %v100 = vld [vmem:[%s5] sm:$0x1]
    %v102 = vperm.slane %v100, 0
    %vm104 = vcmask 130048
    %v106 = vsel %vm104, %v93, 0
    %v109 = vsel %vm104, %v96, 0
    %111 = vmatpush.msra.mxu0 0.0
    %112 = vmatpush.msra.mxu0 0.0
    %113 = vmatpush.msra.mxu0 0.0
    %114 = vmatpush.msra.mxu0 0.0
    %115 = vmatpush.msra.mxu0 0.0
    %116 = vmatpush.msra.mxu0 0.0
    %117 = vmatpush.msra.mxu0 0.0
    %118 = vmatpush.msra.mxu0 0.0
    %119 = vmatpush.msra.mxu0 0.0
    %120 = vmatpush.msra.mxu0 0.0
    %121 = vmatpush.msra.mxu0 0.0
    %122 = vmatpush.msra.mxu0 0.0
    %123 = vmatpush.msra.mxu0 0.0
    %124 = vmatpush.msra.mxu0 0.0
    %125 = vmatpush.msra.mxu0 %v99
    %126 = vmatpush.msra.mxu0 %v98
    %127 = vmatmul.f32.gmra.mxu0 %v106
    %v128 = vpop.f32.mrf.mxu0
    %v129 = vadd.f32 %v102, %v128
    %130 = vmatmul.f32.gmra.mxu0 %v109
    %v131 = vpop.f32.mrf.mxu0
    %v132 = vadd.f32 %v102, %v131
    %133 = vdwg.mxu0
    %v134 = vmax.f32 %v129, 0.0
    %v135 = vmax.f32 %v132, 0.0
    %v136 = vld [vmem:[%s6] sm:$0xff]
    %v137 = vld [vmem:[%s6 + $0x8] sm:$0xff]
    %v138 = vld [vmem:[%s6 + $0x10] sm:$0xff]
    %v139 = vld [vmem:[%s6 + $0x18] sm:$0xff]
    %v140 = vld [vmem:[%s7] sm:$0x1]
    %v142 = vperm.slane %v140, 0
    %vm144 = vcmask 261120
    %v146 = vsel %vm144, %v134, 0
    %v149 = vsel %vm144, %v135, 0
    %151 = vmatpush.msra.mxu0 0.0
    %152 = vmatpush.msra.mxu0 0.0
    %153 = vmatpush.msra.mxu0 0.0
    %154 = vmatpush.msra.mxu0 0.0
    %155 = vmatpush.msra.mxu0 0.0
    %156 = vmatpush.msra.mxu0 0.0
    %157 = vmatpush.msra.mxu0 0.0
    %158 = vmatpush.msra.mxu0 0.0
    %159 = vmatpush.msra.mxu0 0.0
    %160 = vmatpush.msra.mxu0 0.0
    %161 = vmatpush.msra.mxu0 0.0
    %162 = vmatpush.msra.mxu0 0.0
    %163 = vmatpush.msra.mxu0 %v139
    %164 = vmatpush.msra.mxu0 %v138
    %165 = vmatpush.msra.mxu0 %v137
    %166 = vmatpush.msra.mxu0 %v136
    %167 = vmatmul.f32.gmra.mxu0 %v146
    %v168 = vpop.f32.mrf.mxu0
    %v169 = vadd.f32 %v142, %v168
    %170 = vmatmul.f32.gmra.mxu0 %v149
    %v171 = vpop.f32.mrf.mxu0
    %v172 = vadd.f32 %v142, %v171
    %173 = vdwg.mxu0
    %174 = vst.msk [vmem:[#allocation5] sm:$0xff] %vm144, %v169
    %175 = vst.msk [vmem:[#allocation5 + $0x8] sm:$0xff] %vm144, %v172
    %v176 = vld [vmem:[%s1] sm:$0x1]
    %v177 = vlaneseq
    %v178 = vshrl.u32 %v177, 7
    %v179 = vperm.slane %v176, 0
    %vm180 = vcmp.eq.s32.totalorder %v178, %v179
    %v181 = vsel %vm180, 1, 0
    %v182 = vcvt.s32.f32 %v181
    %v184 = vsel %vm104, %v182, 0
    %186 = vmatpush.msra.mxu0 0.0
    %187 = vmatpush.msra.mxu0 0.0
    %188 = vmatpush.msra.mxu0 0.0
    %189 = vmatpush.msra.mxu0 0.0
    %190 = vmatpush.msra.mxu0 0.0
    %191 = vmatpush.msra.mxu0 0.0
    %192 = vmatpush.msra.mxu0 0.0
    %193 = vmatpush.msra.mxu0 0.0
    %194 = vmatpush.msra.mxu0 0.0
    %195 = vmatpush.msra.mxu0 0.0
    %196 = vmatpush.msra.mxu0 0.0
    %197 = vmatpush.msra.mxu0 0.0
    %198 = vmatpush.msra.mxu0 0.0
    %199 = vmatpush.msra.mxu0 0.0
    %200 = vmatpush.msra.mxu0 %v172
    %201 = vmatpush.msra.mxu0 %v169
    %202 = vmatmul.f32.gmra.mxu0 %v184
    %v203 = vpop.f32.mrf.mxu0
    %v204 = vadd.f32 0.0, %v203
    %205 = vdwg.mxu0
    %p206 = scmp.eq.s32.totalorder 0, 0
    // Predicated region
    $region38: #{tpu_custom_call.1} parent=1 // pred_check
      %p207 = pneg %p206
    $region39: #{tpu_custom_call.1} parent=1 // pred_check_branch
      %209 = sbr.rel (%p207) target = $region41
    $region40: #{tpu_custom_call.1} parent=1 // pred_region
      %vm210 = vcmask 254976
      %211 = vst.msk [vmem:[#allocation6] sm:$0x3] %vm210, 0.0
    $region41: #{tpu_custom_call.1} parent=1 // pred_fallthru
      _
    %v212 = vld [vmem:[#allocation6] sm:$0x3]
    %v213 = vadd.f32 %v212, %v204
    %vm214 = vcmask 254976
    %215 = vst.msk [vmem:[#allocation6] sm:$0x3] %vm214, %v213
    // Predicated region
    $region42: #{tpu_custom_call.1} parent=1 // pred_check
      %p216 = pneg %p206
    $region43: #{tpu_custom_call.1} parent=1 // pred_check_branch
      %218 = sbr.rel (%p216) target = $region45
    $region44: #{tpu_custom_call.1} parent=1 // pred_region
      %v219 = vld [vmem:[#allocation6] sm:$0x3]
      %v220 = vld [vmem:[%s3] sm:$0x3]
      %222 = vset.pattern.permute.xlu0 0
      %223 = vperm.xlu0 %222, %v220
      %v224 = vpop.permute.xlu0 %223
      %v226 = vmul.f32 %v219, %v224
      %227 = vst.msk [vmem:[#allocation6] sm:$0x3] %vm214, %v226
    $region45: #{tpu_custom_call.1} parent=1 // pred_fallthru
      _
    // Predicated region
    $region46: #{tpu_custom_call.1} parent=1 // pred_check
      _
    $region47: #{tpu_custom_call.1} parent=1 // pred_check_branch
      %229 = sbr.rel (0) target = $region49
    $region48: #{tpu_custom_call.1} parent=1 // pred_region
      %231 = vsyncadd [#allocation4], 0
      %s232 = sshll.u32 [#allocation5], 4
      %s233 = int_to_ptr.vmem [resolvable:$true] %s232
      %s234 = sshll.u32 %s8, 4
      %s235 = int_to_ptr.hbm [resolvable:$true] %s234
      %240 = dma.vmem_to_hbm [thread:$0]  %s233, 256, %s235, [#allocation4], 128, 128, 8
    $region49: #{tpu_custom_call.1} parent=1 // pred_fallthru
      _
    // Predicated region
    $region50: #{tpu_custom_call.1} parent=1 // pred_check
      _
    $region51: #{tpu_custom_call.1} parent=1 // pred_check_branch
      %242 = sbr.rel (0) target = $region53
    $region52: #{tpu_custom_call.1} parent=1 // pred_region
      %244 = vsyncadd [#allocation7], 0
      %s246 = sshll.u32 [#allocation6], 4
      %s247 = int_to_ptr.vmem [resolvable:$true] %s246
      %s248 = sshll.u32 %s9, 4
      %s249 = int_to_ptr.hbm [resolvable:$true] %s248
      %251 = dma.vmem_to_hbm [thread:$0]  %s247, 32, %s249, [#allocation7]
    $region53: #{tpu_custom_call.1} parent=1 // pred_fallthru
      _
    // Predicated region
    $region54: #{tpu_custom_call.1} parent=1 // pred_check
      _
    $region55: #{tpu_custom_call.1} parent=1 // pred_check_branch
      %253 = sbr.rel (0) target = $region57
    $region56: #{tpu_custom_call.1} parent=1 // pred_region
      %255 = dma.done [#allocation4], 256
    $region57: #{tpu_custom_call.1} parent=1 // pred_fallthru
      _
    // Predicated region
    $region58: #{tpu_custom_call.1} parent=1 // pred_check
      _
    $region59: #{tpu_custom_call.1} parent=1 // pred_check_branch
      %257 = sbr.rel (0) target = $region61
    $region60: #{tpu_custom_call.1} parent=1 // pred_region
      %259 = dma.done [#allocation7], 32
    $region61: #{tpu_custom_call.1} parent=1 // pred_fallthru
      _
    %260 = vsyncpa [#allocation3], 1
    %261 = vsyncpa [#allocation4], 1
    %262 = vsyncpa [#allocation7], 1

</llo_original>
